<compile_context>
chip_gen: v5e
topology: v5e:2x2
jax: 0.10.0
libtpu: 0.0.40
codegen_flags: <defaults>
</compile_context>

<pallas_src>
import numpy as np
import jax
import jax.numpy as jnp
from jax import lax
from jax.experimental import pallas as pl
from jax.experimental.pallas import tpu as pltpu

EPS = 1e-5


def resnet_block_kernel(x_ref, w1_ref, b1_ref, g1_ref, be1_ref,
                        w2_ref, b2_ref, g2_ref, be2_ref, proj_ref,
                        out_ref, pad_ref):
    # x_ref:    (H, L)    unpadded input slab, f32 (also the residual), L = N*W*C
    # w*_ref:   (3, L, L) banded per-dy conv weights (dx taps / channel mix / W-pad folded in)
    # b*/g*/be*_ref: (1, L) conv bias / BN gamma / BN beta, tiled per lane (f32)
    # proj_ref: (L, L)    per-channel averaging projection: 1/(N*H*W) if same channel else 0
    # out_ref:  (H, L)
    # pad_ref:  (H+2, L)  VMEM scratch: H-padded conv input, reused for BOTH convs
    H, L = x_ref.shape
    f32 = jnp.float32

    def conv3x3(w_ref, b_ref):
        # One banded matmul per vertical tap; f32 accumulation on the MXU.
        acc = jnp.dot(pad_ref[0:H, :], w_ref[0], preferred_element_type=f32)
        acc = acc + jnp.dot(pad_ref[1:H + 1, :], w_ref[1], preferred_element_type=f32)
        acc = acc + jnp.dot(pad_ref[2:H + 2, :], w_ref[2], preferred_element_type=f32)
        return acc + b_ref[...]

    def batchnorm(acc, g_ref, be_ref):
        # One-pass train-mode BN (biased variance).  Per-channel mean / E[x^2] are
        # obtained with a lane-space projection matmul (proj already carries the
        # 1/(N*H*W) factor), so everything stays 128 lanes wide and in f32.
        s = jnp.sum(acc, axis=0, keepdims=True)             # (1, L)
        q = jnp.sum(acc * acc, axis=0, keepdims=True)       # (1, L)
        mean_l = jnp.dot(s, proj_ref[...], preferred_element_type=f32)
        ex2_l = jnp.dot(q, proj_ref[...], preferred_element_type=f32)
        rstd_l = lax.rsqrt(ex2_l - mean_l * mean_l + EPS)
        return (acc - mean_l) * (rstd_l * g_ref[...]) + be_ref[...]

    # ---- stage x as the H-padded conv1 input; zero the 2 halo rows exactly once ----
    pad_ref[0:1, :] = jnp.zeros((1, L), pad_ref.dtype)
    pad_ref[H + 1:H + 2, :] = jnp.zeros((1, L), pad_ref.dtype)
    pad_ref[1:H + 1, :] = x_ref[...].astype(pad_ref.dtype)

    # ---- Conv1 + BN1 + ReLU ----
    # acc1/h1 are (H, L) = (16, 128) f32 here (2 vregs) so they stay in registers; a
    # realistic-shape gridded variant would hold them in VMEM scratch instead.
    h1 = jnp.maximum(batchnorm(conv3x3(w1_ref, b1_ref), g1_ref, be1_ref), 0.0)

    # ---- restage interior rows with h1 (halo rows are still zero from above) ----
    pad_ref[1:H + 1, :] = h1.astype(pad_ref.dtype)

    # ---- Conv2 + BN2 ----
    h2 = batchnorm(conv3x3(w2_ref, b2_ref), g2_ref, be2_ref)

    # ---- residual add + ReLU; fully lane-dense (128-lane) store ----
    out_ref[...] = jnp.maximum(x_ref[...] + h2, 0.0)


def _build_banded_weights(w_hwio, n_img, width):
    """Fold the dx taps, channel mixing, width zero-padding and per-image block
    structure of a 3x3 / stride-1 / pad-1 conv into 3 banded (L, L) matrices
    (one per vertical tap dy), with L = n_img * width * C.  Host-side constant prep."""
    w = np.asarray(w_hwio, dtype=np.float32)            # (3, 3, Cin, Cout), Cin == Cout
    C = w.shape[2]
    wc = width * C
    band = np.zeros((3, width, C, width, C), np.float32)
    for dy in range(3):
        for dx in range(3):
            for xo in range(width):
                xi = xo + dx - 1
                if 0 <= xi < width:                     # taps outside [0, W) = zero pad
                    band[dy, xi, :, xo, :] = w[dy, dx]
    band = band.reshape(3, wc, wc)
    big = np.zeros((3, n_img * wc, n_img * wc), np.float32)
    for n in range(n_img):                              # no cross-image mixing
        big[:, n * wc:(n + 1) * wc, n * wc:(n + 1) * wc] = band
    return jnp.asarray(big)


def resnet_block_pallas(x_nhwc, params, *, matmul_dtype=jnp.float32):
    """x_nhwc: (N, H, W, C) float32.  Returns (N, H, W, C) float32.

    matmul_dtype=jnp.bfloat16 feeds the MXU bf16 operands on v5e/v6e/v7x (accumulation,
    BN statistics, normalization and the residual add stay f32).  Default f32 matches
    the f32 reference.
    """
    N, H, W, C = x_nhwc.shape
    L = N * W * C

    # ---- layout glue (outside the kernel): fold (n, w, c) onto the lane axis ----
    x_slab = jnp.transpose(x_nhwc, (1, 0, 2, 3)).reshape(H, L)      # (H, N*W*C), f32

    w1_big = _build_banded_weights(params["w1"], N, W).astype(matmul_dtype)
    w2_big = _build_banded_weights(params["w2"], N, W).astype(matmul_dtype)

    def lane_tile(v):                                               # (1, C) -> (1, L) f32
        return jnp.tile(v.reshape(1, C), (1, N * W)).astype(jnp.float32)

    # Per-channel averaging projection (includes the 1/(N*H*W) factor).
    proj = jnp.asarray(
        np.tile(np.eye(C, dtype=np.float32), (N * W, N * W)) / float(N * H * W))

    out_slab = pl.pallas_call(
        resnet_block_kernel,
        out_shape=jax.ShapeDtypeStruct((H, L), jnp.float32),
        scratch_shapes=[pltpu.VMEM((H + 2, L), matmul_dtype)],
    )(x_slab,
      w1_big, lane_tile(params["b1"]), lane_tile(params["g1"]), lane_tile(params["be1"]),
      w2_big, lane_tile(params["b2"]), lane_tile(params["g2"]), lane_tile(params["be2"]),
      proj)

    # layout glue back to NHWC
    return jnp.transpose(out_slab.reshape(H, N, W, C), (1, 0, 2, 3))


def resnet_block_reference(x_nhwc, params):
    """Pure-JAX reference matching the PyTorch forward (train-mode BN)."""
    def conv(x, w, b):
        y = lax.conv_general_dilated(
            x, w, window_strides=(1, 1), padding="SAME",
            dimension_numbers=("NHWC", "HWIO", "NHWC"))
        return y + b.reshape(1, 1, 1, -1)

    def bn(x, g, be):
        m = x.mean(axis=(0, 1, 2), keepdims=True)
        v = ((x - m) ** 2).mean(axis=(0, 1, 2), keepdims=True)
        return (x - m) / jnp.sqrt(v + EPS) * g.reshape(1, 1, 1, -1) \
            + be.reshape(1, 1, 1, -1)

    h = jax.nn.relu(bn(conv(x_nhwc, params["w1"], params["b1"]),
                       params["g1"], params["be1"]))
    h = bn(conv(h, params["w2"], params["b2"]), params["g2"], params["be2"])
    return jax.nn.relu(x_nhwc + h)


def init_params(key, c):
    k1, k2, k3, k4 = jax.random.split(key, 4)
    scale = 0.1
    return {
        # HWIO conv weights
        "w1": scale * jax.random.normal(k1, (3, 3, c, c), jnp.float32),
        "b1": scale * jax.random.normal(k2, (1, c), jnp.float32),
        "g1": jnp.ones((1, c), jnp.float32),    # BatchNorm2d default weight
        "be1": jnp.zeros((1, c), jnp.float32),  # BatchNorm2d default bias
        "w2": scale * jax.random.normal(k3, (3, 3, c, c), jnp.float32),
        "b2": scale * jax.random.normal(k4, (1, c), jnp.float32),
        "g2": jnp.ones((1, c), jnp.float32),
        "be2": jnp.zeros((1, c), jnp.float32),
    }


if __name__ == "__main__":
    # Non-downsample path requires in_ch == out_ch.  N*W*C = 128 -> fully lane-dense slab.
    N, C, H, W = 2, 4, 16, 16

    key = jax.random.PRNGKey(0)
    kx, kp = jax.random.split(key)
    x_nchw = jax.random.normal(kx, (N, C, H, W), jnp.float32)   # PyTorch-style NCHW input
    x_nhwc = jnp.transpose(x_nchw, (0, 2, 3, 1))                # kernel wrapper layout: NHWC

    params = init_params(kp, C)

    y = resnet_block_pallas(x_nhwc, params)
    y = jax.block_until_ready(y)

    y_ref = resnet_block_reference(x_nhwc, params)
    assert y.shape == (N, H, W, C)
    assert jnp.allclose(y, y_ref, atol=1e-3, rtol=1e-3), "mismatch vs reference"

    print("KERNEL_OK")
</pallas_src>

<mosaic_0001>
module attributes {stable_mosaic.version = 11 : i64} {
  func.func @resnet_block_kernel(%arg0: memref<16x128xf32, #tpu.memory_space<vmem>>, %arg1: memref<3x128x128xf32, #tpu.memory_space<vmem>>, %arg2: memref<1x128xf32, #tpu.memory_space<vmem>>, %arg3: memref<1x128xf32, #tpu.memory_space<vmem>>, %arg4: memref<1x128xf32, #tpu.memory_space<vmem>>, %arg5: memref<3x128x128xf32, #tpu.memory_space<vmem>>, %arg6: memref<1x128xf32, #tpu.memory_space<vmem>>, %arg7: memref<1x128xf32, #tpu.memory_space<vmem>>, %arg8: memref<1x128xf32, #tpu.memory_space<vmem>>, %arg9: memref<128x128xf32, #tpu.memory_space<vmem>>, %arg10: memref<16x128xf32, #tpu.memory_space<vmem>>, %arg11: memref<18x128xf32, #tpu.memory_space<vmem>>) attributes {dimension_semantics = [], scalar_prefetch = 0 : i64, scratch_operands = 1 : i64, tpu.core_type = #tpu.core_type<tc>} {
    %cst = arith.constant 0.000000e+00 : f32
    %0 = vector.broadcast %cst : f32 to vector<1x128xf32>
    %c0 = arith.constant 0 : index
    %c0_0 = arith.constant 0 : index
    %1 = vector.load %arg11[%c0, %c0_0] : memref<18x128xf32, #tpu.memory_space<vmem>>, vector<1x128xf32>
    tpu.vector_store %arg11[%c0, %c0_0], %0 {strides = array<i32>} : memref<18x128xf32, #tpu.memory_space<vmem>>, vector<1x128xf32>,
    %cst_1 = arith.constant 0.000000e+00 : f32
    %2 = vector.broadcast %cst_1 : f32 to vector<1x128xf32>
    %c17 = arith.constant 17 : index
    %c0_2 = arith.constant 0 : index
    %3 = vector.load %arg11[%c17, %c0_2] : memref<18x128xf32, #tpu.memory_space<vmem>>, vector<1x128xf32>
    tpu.vector_store %arg11[%c17, %c0_2], %2 {strides = array<i32>} : memref<18x128xf32, #tpu.memory_space<vmem>>, vector<1x128xf32>,
    %c0_3 = arith.constant 0 : index
    %c0_4 = arith.constant 0 : index
    %4 = vector.load %arg0[%c0_3, %c0_4] : memref<16x128xf32, #tpu.memory_space<vmem>>, vector<16x128xf32>
    %c1 = arith.constant 1 : index
    %c0_5 = arith.constant 0 : index
    %5 = vector.load %arg11[%c1, %c0_5] : memref<18x128xf32, #tpu.memory_space<vmem>>, vector<16x128xf32>
    tpu.vector_store %arg11[%c1, %c0_5], %4 {strides = array<i32>} : memref<18x128xf32, #tpu.memory_space<vmem>>, vector<16x128xf32>,
    %c0_6 = arith.constant 0 : index
    %c0_7 = arith.constant 0 : index
    %6 = vector.load %arg11[%c0_6, %c0_7] : memref<18x128xf32, #tpu.memory_space<vmem>>, vector<16x128xf32>
    %c0_8 = arith.constant 0 : index
    %c0_9 = arith.constant 0 : index
    %c0_10 = arith.constant 0 : index
    %7 = vector.load %arg1[%c0_8, %c0_9, %c0_10] : memref<3x128x128xf32, #tpu.memory_space<vmem>>, vector<1x128x128xf32>
    %8 = vector.shape_cast %7 : vector<1x128x128xf32> to vector<128x128xf32>
    %cst_11 = arith.constant dense<0.000000e+00> : vector<16x128xf32>
    %9 = tpu.matmul %6, %8, %cst_11 {dimension_numbers = #tpu.dot_dimension_numbers<[1], [0], [0], [1], [0, 0, 1, 1], [], []>} : vector<16x128xf32>, vector<128x128xf32>, vector<16x128xf32> -> vector<16x128xf32>
    %c1_12 = arith.constant 1 : index
    %c0_13 = arith.constant 0 : index
    %10 = vector.load %arg11[%c1_12, %c0_13] : memref<18x128xf32, #tpu.memory_space<vmem>>, vector<16x128xf32>
    %c1_14 = arith.constant 1 : index
    %c0_15 = arith.constant 0 : index
    %c0_16 = arith.constant 0 : index
    %11 = vector.load %arg1[%c1_14, %c0_15, %c0_16] : memref<3x128x128xf32, #tpu.memory_space<vmem>>, vector<1x128x128xf32>
    %12 = vector.shape_cast %11 : vector<1x128x128xf32> to vector<128x128xf32>
    %cst_17 = arith.constant dense<0.000000e+00> : vector<16x128xf32>
    %13 = tpu.matmul %10, %12, %cst_17 {dimension_numbers = #tpu.dot_dimension_numbers<[1], [0], [0], [1], [0, 0, 1, 1], [], []>} : vector<16x128xf32>, vector<128x128xf32>, vector<16x128xf32> -> vector<16x128xf32>
    %14 = arith.addf %9, %13 : vector<16x128xf32>
    %c2 = arith.constant 2 : index
    %c0_18 = arith.constant 0 : index
    %15 = vector.load %arg11[%c2, %c0_18] : memref<18x128xf32, #tpu.memory_space<vmem>>, vector<16x128xf32>
    %c2_19 = arith.constant 2 : index
    %c0_20 = arith.constant 0 : index
    %c0_21 = arith.constant 0 : index
    %16 = vector.load %arg1[%c2_19, %c0_20, %c0_21] : memref<3x128x128xf32, #tpu.memory_space<vmem>>, vector<1x128x128xf32>
    %17 = vector.shape_cast %16 : vector<1x128x128xf32> to vector<128x128xf32>
    %cst_22 = arith.constant dense<0.000000e+00> : vector<16x128xf32>
    %18 = tpu.matmul %15, %17, %cst_22 {dimension_numbers = #tpu.dot_dimension_numbers<[1], [0], [0], [1], [0, 0, 1, 1], [], []>} : vector<16x128xf32>, vector<128x128xf32>, vector<16x128xf32> -> vector<16x128xf32>
    %19 = arith.addf %14, %18 : vector<16x128xf32>
    %c0_23 = arith.constant 0 : index
    %c0_24 = arith.constant 0 : index
    %20 = vector.load %arg2[%c0_23, %c0_24] : memref<1x128xf32, #tpu.memory_space<vmem>>, vector<1x128xf32>
    %21 = vector.broadcast %20 : vector<1x128xf32> to vector<16x128xf32>
    %22 = arith.addf %19, %21 : vector<16x128xf32>
    %cst_25 = arith.constant dense<0.000000e+00> : vector<128xf32>
    %23 = vector.multi_reduction <add>, %22, %cst_25 [0] : vector<16x128xf32> to vector<128xf32>
    %24 = vector.shape_cast %23 : vector<128xf32> to vector<1x128xf32>
    %25 = arith.mulf %22, %22 : vector<16x128xf32>
    %cst_26 = arith.constant dense<0.000000e+00> : vector<128xf32>
    %26 = vector.multi_reduction <add>, %25, %cst_26 [0] : vector<16x128xf32> to vector<128xf32>
    %27 = vector.shape_cast %26 : vector<128xf32> to vector<1x128xf32>
    %c0_27 = arith.constant 0 : index
    %c0_28 = arith.constant 0 : index
    %28 = vector.load %arg9[%c0_27, %c0_28] : memref<128x128xf32, #tpu.memory_space<vmem>>, vector<128x128xf32>
    %cst_29 = arith.constant dense<0.000000e+00> : vector<1x128xf32>
    %29 = tpu.matmul %24, %28, %cst_29 {dimension_numbers = #tpu.dot_dimension_numbers<[1], [0], [0], [1], [0, 0, 1, 1], [], []>} : vector<1x128xf32>, vector<128x128xf32>, vector<1x128xf32> -> vector<1x128xf32>
    %c0_30 = arith.constant 0 : index
    %c0_31 = arith.constant 0 : index
    %30 = vector.load %arg9[%c0_30, %c0_31] : memref<128x128xf32, #tpu.memory_space<vmem>>, vector<128x128xf32>
    %cst_32 = arith.constant dense<0.000000e+00> : vector<1x128xf32>
    %31 = tpu.matmul %27, %30, %cst_32 {dimension_numbers = #tpu.dot_dimension_numbers<[1], [0], [0], [1], [0, 0, 1, 1], [], []>} : vector<1x128xf32>, vector<128x128xf32>, vector<1x128xf32> -> vector<1x128xf32>
    %32 = arith.mulf %29, %29 : vector<1x128xf32>
    %33 = arith.subf %31, %32 : vector<1x128xf32>
    %cst_33 = arith.constant 9.99999974E-6 : f32
    %34 = vector.broadcast %cst_33 : f32 to vector<1x128xf32>
    %35 = arith.addf %33, %34 : vector<1x128xf32>
    %36 = math.rsqrt %35 : vector<1x128xf32>
    %37 = vector.broadcast %29 : vector<1x128xf32> to vector<16x128xf32>
    %38 = arith.subf %22, %37 : vector<16x128xf32>
    %c0_34 = arith.constant 0 : index
    %c0_35 = arith.constant 0 : index
    %39 = vector.load %arg3[%c0_34, %c0_35] : memref<1x128xf32, #tpu.memory_space<vmem>>, vector<1x128xf32>
    %40 = arith.mulf %36, %39 : vector<1x128xf32>
    %41 = vector.broadcast %40 : vector<1x128xf32> to vector<16x128xf32>
    %42 = arith.mulf %38, %41 : vector<16x128xf32>
    %c0_36 = arith.constant 0 : index
    %c0_37 = arith.constant 0 : index
    %43 = vector.load %arg4[%c0_36, %c0_37] : memref<1x128xf32, #tpu.memory_space<vmem>>, vector<1x128xf32>
    %44 = vector.broadcast %43 : vector<1x128xf32> to vector<16x128xf32>
    %45 = arith.addf %42, %44 : vector<16x128xf32>
    %cst_38 = arith.constant 0.000000e+00 : f32
    %46 = vector.broadcast %cst_38 : f32 to vector<16x128xf32>
    %47 = arith.maximumf %45, %46 : vector<16x128xf32>
    %c1_39 = arith.constant 1 : index
    %c0_40 = arith.constant 0 : index
    %48 = vector.load %arg11[%c1_39, %c0_40] : memref<18x128xf32, #tpu.memory_space<vmem>>, vector<16x128xf32>
    tpu.vector_store %arg11[%c1_39, %c0_40], %47 {strides = array<i32>} : memref<18x128xf32, #tpu.memory_space<vmem>>, vector<16x128xf32>,
    %c0_41 = arith.constant 0 : index
    %c0_42 = arith.constant 0 : index
    %49 = vector.load %arg11[%c0_41, %c0_42] : memref<18x128xf32, #tpu.memory_space<vmem>>, vector<16x128xf32>
    %c0_43 = arith.constant 0 : index
    %c0_44 = arith.constant 0 : index
    %c0_45 = arith.constant 0 : index
    %50 = vector.load %arg5[%c0_43, %c0_44, %c0_45] : memref<3x128x128xf32, #tpu.memory_space<vmem>>, vector<1x128x128xf32>
    %51 = vector.shape_cast %50 : vector<1x128x128xf32> to vector<128x128xf32>
    %cst_46 = arith.constant dense<0.000000e+00> : vector<16x128xf32>
    %52 = tpu.matmul %49, %51, %cst_46 {dimension_numbers = #tpu.dot_dimension_numbers<[1], [0], [0], [1], [0, 0, 1, 1], [], []>} : vector<16x128xf32>, vector<128x128xf32>, vector<16x128xf32> -> vector<16x128xf32>
    %c1_47 = arith.constant 1 : index
    %c0_48 = arith.constant 0 : index
    %53 = vector.load %arg11[%c1_47, %c0_48] : memref<18x128xf32, #tpu.memory_space<vmem>>, vector<16x128xf32>
    %c1_49 = arith.constant 1 : index
    %c0_50 = arith.constant 0 : index
    %c0_51 = arith.constant 0 : index
    %54 = vector.load %arg5[%c1_49, %c0_50, %c0_51] : memref<3x128x128xf32, #tpu.memory_space<vmem>>, vector<1x128x128xf32>
    %55 = vector.shape_cast %54 : vector<1x128x128xf32> to vector<128x128xf32>
    %cst_52 = arith.constant dense<0.000000e+00> : vector<16x128xf32>
    %56 = tpu.matmul %53, %55, %cst_52 {dimension_numbers = #tpu.dot_dimension_numbers<[1], [0], [0], [1], [0, 0, 1, 1], [], []>} : vector<16x128xf32>, vector<128x128xf32>, vector<16x128xf32> -> vector<16x128xf32>
    %57 = arith.addf %52, %56 : vector<16x128xf32>
    %c2_53 = arith.constant 2 : index
    %c0_54 = arith.constant 0 : index
    %58 = vector.load %arg11[%c2_53, %c0_54] : memref<18x128xf32, #tpu.memory_space<vmem>>, vector<16x128xf32>
    %c2_55 = arith.constant 2 : index
    %c0_56 = arith.constant 0 : index
    %c0_57 = arith.constant 0 : index
    %59 = vector.load %arg5[%c2_55, %c0_56, %c0_57] : memref<3x128x128xf32, #tpu.memory_space<vmem>>, vector<1x128x128xf32>
    %60 = vector.shape_cast %59 : vector<1x128x128xf32> to vector<128x128xf32>
    %cst_58 = arith.constant dense<0.000000e+00> : vector<16x128xf32>
    %61 = tpu.matmul %58, %60, %cst_58 {dimension_numbers = #tpu.dot_dimension_numbers<[1], [0], [0], [1], [0, 0, 1, 1], [], []>} : vector<16x128xf32>, vector<128x128xf32>, vector<16x128xf32> -> vector<16x128xf32>
    %62 = arith.addf %57, %61 : vector<16x128xf32>
    %c0_59 = arith.constant 0 : index
    %c0_60 = arith.constant 0 : index
    %63 = vector.load %arg6[%c0_59, %c0_60] : memref<1x128xf32, #tpu.memory_space<vmem>>, vector<1x128xf32>
    %64 = vector.broadcast %63 : vector<1x128xf32> to vector<16x128xf32>
    %65 = arith.addf %62, %64 : vector<16x128xf32>
    %cst_61 = arith.constant dense<0.000000e+00> : vector<128xf32>
    %66 = vector.multi_reduction <add>, %65, %cst_61 [0] : vector<16x128xf32> to vector<128xf32>
    %67 = vector.shape_cast %66 : vector<128xf32> to vector<1x128xf32>
    %68 = arith.mulf %65, %65 : vector<16x128xf32>
    %cst_62 = arith.constant dense<0.000000e+00> : vector<128xf32>
    %69 = vector.multi_reduction <add>, %68, %cst_62 [0] : vector<16x128xf32> to vector<128xf32>
    %70 = vector.shape_cast %69 : vector<128xf32> to vector<1x128xf32>
    %c0_63 = arith.constant 0 : index
    %c0_64 = arith.constant 0 : index
    %71 = vector.load %arg9[%c0_63, %c0_64] : memref<128x128xf32, #tpu.memory_space<vmem>>, vector<128x128xf32>
    %cst_65 = arith.constant dense<0.000000e+00> : vector<1x128xf32>
    %72 = tpu.matmul %67, %71, %cst_65 {dimension_numbers = #tpu.dot_dimension_numbers<[1], [0], [0], [1], [0, 0, 1, 1], [], []>} : vector<1x128xf32>, vector<128x128xf32>, vector<1x128xf32> -> vector<1x128xf32>
    %c0_66 = arith.constant 0 : index
    %c0_67 = arith.constant 0 : index
    %73 = vector.load %arg9[%c0_66, %c0_67] : memref<128x128xf32, #tpu.memory_space<vmem>>, vector<128x128xf32>
    %cst_68 = arith.constant dense<0.000000e+00> : vector<1x128xf32>
    %74 = tpu.matmul %70, %73, %cst_68 {dimension_numbers = #tpu.dot_dimension_numbers<[1], [0], [0], [1], [0, 0, 1, 1], [], []>} : vector<1x128xf32>, vector<128x128xf32>, vector<1x128xf32> -> vector<1x128xf32>
    %75 = arith.mulf %72, %72 : vector<1x128xf32>
    %76 = arith.subf %74, %75 : vector<1x128xf32>
    %cst_69 = arith.constant 9.99999974E-6 : f32
    %77 = vector.broadcast %cst_69 : f32 to vector<1x128xf32>
    %78 = arith.addf %76, %77 : vector<1x128xf32>
    %79 = math.rsqrt %78 : vector<1x128xf32>
    %80 = vector.broadcast %72 : vector<1x128xf32> to vector<16x128xf32>
    %81 = arith.subf %65, %80 : vector<16x128xf32>
    %c0_70 = arith.constant 0 : index
    %c0_71 = arith.constant 0 : index
    %82 = vector.load %arg7[%c0_70, %c0_71] : memref<1x128xf32, #tpu.memory_space<vmem>>, vector<1x128xf32>
    %83 = arith.mulf %79, %82 : vector<1x128xf32>
    %84 = vector.broadcast %83 : vector<1x128xf32> to vector<16x128xf32>
    %85 = arith.mulf %81, %84 : vector<16x128xf32>
    %c0_72 = arith.constant 0 : index
    %c0_73 = arith.constant 0 : index
    %86 = vector.load %arg8[%c0_72, %c0_73] : memref<1x128xf32, #tpu.memory_space<vmem>>, vector<1x128xf32>
    %87 = vector.broadcast %86 : vector<1x128xf32> to vector<16x128xf32>
    %88 = arith.addf %85, %87 : vector<16x128xf32>
    %c0_74 = arith.constant 0 : index
    %c0_75 = arith.constant 0 : index
    %89 = vector.load %arg0[%c0_74, %c0_75] : memref<16x128xf32, #tpu.memory_space<vmem>>, vector<16x128xf32>
    %90 = arith.addf %89, %88 : vector<16x128xf32>
    %cst_76 = arith.constant 0.000000e+00 : f32
    %91 = vector.broadcast %cst_76 : f32 to vector<16x128xf32>
    %92 = arith.maximumf %90, %91 : vector<16x128xf32>
    %c0_77 = arith.constant 0 : index
    %c0_78 = arith.constant 0 : index
    %93 = vector.load %arg10[%c0_77, %c0_78] : memref<16x128xf32, #tpu.memory_space<vmem>>, vector<16x128xf32>
    tpu.vector_store %arg10[%c0_77, %c0_78], %92 {strides = array<i32>} : memref<16x128xf32, #tpu.memory_space<vmem>>, vector<16x128xf32>,
    return
  }
}

</mosaic_0001>

<llo_original>
// kernel: tpu_custom_call.1
$region0: #{tpu_custom_call.1}
  #allocation0 [shape = 'u32[]', space=smem, size = 0x4, offset = 0x4, fixed_abs, tag = 'smem constant byte address 0x4 - core index']
  #allocation1 [shape = 'u32[72,128]{1,0:T(1,128)}', space=vmem, size = 0x9000, scoped, tag = 'internal scratch']
  #allocation2 [shape = 'f32[18,128]{1,0:T(8,128)}', space=vmem, size = 0x3000, scoped, tag = 'scratch operand']
  %s0 = inlined_call_operand.hbm [shape: f32[16,128], index: 0, kind: input, shape index: {}]
  %s1 = inlined_call_operand.hbm [shape: f32[3,128,128], index: 1, kind: input, shape index: {}]
  %s2 = inlined_call_operand.vmem [shape: f32[1,128], index: 2, kind: input, shape index: {}]
  %s3 = inlined_call_operand.vmem [shape: f32[1,128], index: 3, kind: input, shape index: {}]
  %s4 = inlined_call_operand.vmem [shape: f32[1,128], index: 4, kind: input, shape index: {}]
  %s5 = inlined_call_operand.hbm [shape: f32[3,128,128], index: 5, kind: input, shape index: {}]
  %s6 = inlined_call_operand.vmem [shape: f32[1,128], index: 6, kind: input, shape index: {}]
  %s7 = inlined_call_operand.vmem [shape: f32[1,128], index: 7, kind: input, shape index: {}]
  %s8 = inlined_call_operand.vmem [shape: f32[1,128], index: 8, kind: input, shape index: {}]
  %s9 = inlined_call_operand.hbm [shape: f32[128,128], index: 9, kind: input, shape index: {}]
  %s10 = inlined_call_operand.hbm [shape: f32[16,128], index: 10, kind: output, shape index: {}]
  %s11 = sld [smem:[#allocation0]]
  $region66: #{tpu_custom_call.1} parent=0
    _
  %s13 = ssub.s32 1, %s11
  %s14 = scalar_select 0, %s13, %s11
  $region1: #{tpu_custom_call.1} parent=0
    #allocation3 [shape = 'u8[8192]{0}', space=vmem, size = 0x2000, scoped, tag = 'input window, operand 0, single buffered']
    #allocation4 [shape = 's32[1]{0}', space=sflag, size = 0x4, scoped, tag = 'scoped memory for tpu_custom_call.1']
    #allocation5 [shape = 's32[1]{0}', space=sflag, size = 0x4, scoped, tag = 'scoped memory for tpu_custom_call.1']
    #allocation6 [shape = 'u8[196608]{0}', space=vmem, size = 0x30000, scoped, tag = 'input window, operand 1, single buffered']
    #allocation7 [shape = 's32[1]{0}', space=sflag, size = 0x4, scoped, tag = 'scoped memory for tpu_custom_call.1']
    #allocation8 [shape = 'u8[196608]{0}', space=vmem, size = 0x30000, scoped, tag = 'input window, operand 5, single buffered']
    #allocation9 [shape = 'u8[65536]{0}', space=vmem, size = 0x10000, scoped, tag = 'input window, operand 9, single buffered']
    #allocation10 [shape = 's32[1]{0}', space=sflag, size = 0x4, scoped, tag = 'scoped memory for tpu_custom_call.1']
    #allocation11 [shape = 'u8[8192]{0}', space=vmem, size = 0x2000, scoped, tag = 'output window, operand 0, single buffered']
    %15 = vsyncpa [#allocation4], 0
    %16 = vsyncpa [#allocation7], 0
    %17 = vsyncpa [#allocation10], 0
    %18 = vsyncpa [#allocation5], 0
    // Predicated region
    $region2: #{tpu_custom_call.1} parent=1 // pred_check
      _
    $region3: #{tpu_custom_call.1} parent=1 // pred_check_branch
      %20 = sbr.rel (0) target = $region5
    $region4: #{tpu_custom_call.1} parent=1 // pred_region
      %22 = vsyncadd [#allocation4], 0
      %s23 = sshll.u32 %s0, 4
      %s24 = int_to_ptr.hbm [resolvable:$true] %s23
      %s25 = sshll.u32 [#allocation3], 4
      %s26 = int_to_ptr.vmem [resolvable:$true] %s25
      %31 = dma.hbm_to_vmem [thread:$0]  %s24, 256, %s26, [#allocation4], 128, 128, 8
    $region5: #{tpu_custom_call.1} parent=1 // pred_fallthru
      _
    // Predicated region
    $region6: #{tpu_custom_call.1} parent=1 // pred_check
      _
    $region7: #{tpu_custom_call.1} parent=1 // pred_check_branch
      %33 = sbr.rel (0) target = $region9
    $region8: #{tpu_custom_call.1} parent=1 // pred_region
      %35 = vsyncadd [#allocation7], 0
      %s36 = sshll.u32 %s1, 4
      %s37 = int_to_ptr.hbm [resolvable:$true] %s36
      %s38 = sshll.u32 [#allocation6], 4
      %s39 = int_to_ptr.vmem [resolvable:$true] %s38
      %44 = dma.hbm_to_vmem [thread:$0]  %s37, 6144, %s39, [#allocation7], 128, 128, 8
    $region9: #{tpu_custom_call.1} parent=1 // pred_fallthru
      _
    // Predicated region
    $region10: #{tpu_custom_call.1} parent=1 // pred_check
      _
    $region11: #{tpu_custom_call.1} parent=1 // pred_check_branch
      %46 = sbr.rel (0) target = $region13
    $region12: #{tpu_custom_call.1} parent=1 // pred_region
      _
    $region13: #{tpu_custom_call.1} parent=1 // pred_fallthru
      _
    // Predicated region
    $region14: #{tpu_custom_call.1} parent=1 // pred_check
      _
    $region15: #{tpu_custom_call.1} parent=1 // pred_check_branch
      %48 = sbr.rel (0) target = $region17
    $region16: #{tpu_custom_call.1} parent=1 // pred_region
      _
    $region17: #{tpu_custom_call.1} parent=1 // pred_fallthru
      _
    // Predicated region
    $region18: #{tpu_custom_call.1} parent=1 // pred_check
      _
    $region19: #{tpu_custom_call.1} parent=1 // pred_check_branch
      %50 = sbr.rel (0) target = $region21
    $region20: #{tpu_custom_call.1} parent=1 // pred_region
      _
    $region21: #{tpu_custom_call.1} parent=1 // pred_fallthru
      _
    // Predicated region
    $region22: #{tpu_custom_call.1} parent=1 // pred_check
      _
    $region23: #{tpu_custom_call.1} parent=1 // pred_check_branch
      %52 = sbr.rel (0) target = $region25
    $region24: #{tpu_custom_call.1} parent=1 // pred_region
      %54 = vsyncadd [#allocation7], 0
      %s55 = sshll.u32 %s5, 4
      %s56 = int_to_ptr.hbm [resolvable:$true] %s55
      %s57 = sshll.u32 [#allocation8], 4
      %s58 = int_to_ptr.vmem [resolvable:$true] %s57
      %63 = dma.hbm_to_vmem [thread:$0]  %s56, 6144, %s58, [#allocation7], 128, 128, 8
    $region25: #{tpu_custom_call.1} parent=1 // pred_fallthru
      _
    // Predicated region
    $region26: #{tpu_custom_call.1} parent=1 // pred_check
      _
    $region27: #{tpu_custom_call.1} parent=1 // pred_check_branch
      %65 = sbr.rel (0) target = $region29
    $region28: #{tpu_custom_call.1} parent=1 // pred_region
      _
    $region29: #{tpu_custom_call.1} parent=1 // pred_fallthru
      _
    // Predicated region
    $region30: #{tpu_custom_call.1} parent=1 // pred_check
      _
    $region31: #{tpu_custom_call.1} parent=1 // pred_check_branch
      %67 = sbr.rel (0) target = $region33
    $region32: #{tpu_custom_call.1} parent=1 // pred_region
      _
    $region33: #{tpu_custom_call.1} parent=1 // pred_fallthru
      _
    // Predicated region
    $region34: #{tpu_custom_call.1} parent=1 // pred_check
      _
    $region35: #{tpu_custom_call.1} parent=1 // pred_check_branch
      %69 = sbr.rel (0) target = $region37
    $region36: #{tpu_custom_call.1} parent=1 // pred_region
      _
    $region37: #{tpu_custom_call.1} parent=1 // pred_fallthru
      _
    // Predicated region
    $region38: #{tpu_custom_call.1} parent=1 // pred_check
      _
    $region39: #{tpu_custom_call.1} parent=1 // pred_check_branch
      %71 = sbr.rel (0) target = $region41
    $region40: #{tpu_custom_call.1} parent=1 // pred_region
      %73 = vsyncadd [#allocation10], 0
      %s74 = sshll.u32 %s9, 4
      %s75 = int_to_ptr.hbm [resolvable:$true] %s74
      %s76 = sshll.u32 [#allocation9], 4
      %s77 = int_to_ptr.vmem [resolvable:$true] %s76
      %82 = dma.hbm_to_vmem [thread:$0]  %s75, 2048, %s77, [#allocation10], 128, 128, 8
    $region41: #{tpu_custom_call.1} parent=1 // pred_fallthru
      _
    // Predicated region
    $region42: #{tpu_custom_call.1} parent=1 // pred_check
      _
    $region43: #{tpu_custom_call.1} parent=1 // pred_check_branch
      %84 = sbr.rel (0) target = $region45
    $region44: #{tpu_custom_call.1} parent=1 // pred_region
      %86 = dma.done [#allocation4], 256
    $region45: #{tpu_custom_call.1} parent=1 // pred_fallthru
      _
    // Predicated region
    $region46: #{tpu_custom_call.1} parent=1 // pred_check
      _
    $region47: #{tpu_custom_call.1} parent=1 // pred_check_branch
      %88 = sbr.rel (0) target = $region49
    $region48: #{tpu_custom_call.1} parent=1 // pred_region
      %90 = dma.done [#allocation7], 6144
    $region49: #{tpu_custom_call.1} parent=1 // pred_fallthru
      _
    // Predicated region
    $region50: #{tpu_custom_call.1} parent=1 // pred_check
      _
    $region51: #{tpu_custom_call.1} parent=1 // pred_check_branch
      %92 = sbr.rel (0) target = $region53
    $region52: #{tpu_custom_call.1} parent=1 // pred_region
      %94 = dma.done [#allocation7], 6144
    $region53: #{tpu_custom_call.1} parent=1 // pred_fallthru
      _
    // Predicated region
    $region54: #{tpu_custom_call.1} parent=1 // pred_check
      _
    $region55: #{tpu_custom_call.1} parent=1 // pred_check_branch
      %96 = sbr.rel (0) target = $region57
    $region56: #{tpu_custom_call.1} parent=1 // pred_region
      %98 = dma.done [#allocation10], 2048
    $region57: #{tpu_custom_call.1} parent=1 // pred_fallthru
      _
    %99 = vst [vmem:[#allocation2] sm:$0x1] 0.0
    %100 = vst [vmem:[#allocation2 + $0x11] sm:$0x1] 0.0
    %v101 = vld [vmem:[#allocation3] sm:$0xff]
    %v102 = vld [vmem:[#allocation3 + $0x8] sm:$0xff]
    %103 = vst [vmem:[#allocation2 + $0x1] sm:$0xff] %v101
    %104 = vst [vmem:[#allocation2 + $0x9] sm:$0xff] %v102
    %v105 = vld [vmem:[#allocation2] sm:$0xff]
    %v106 = vld [vmem:[#allocation2 + $0x8] sm:$0xff]
    %v107 = vld [vmem:[#allocation6] sm:$0xff]
    %v108 = vld [vmem:[#allocation6 + $0x8] sm:$0xff]
    %v109 = vld [vmem:[#allocation6 + $0x10] sm:$0xff]
    %v110 = vld [vmem:[#allocation6 + $0x18] sm:$0xff]
    %v111 = vld [vmem:[#allocation6 + $0x20] sm:$0xff]
    %v112 = vld [vmem:[#allocation6 + $0x28] sm:$0xff]
    %v113 = vld [vmem:[#allocation6 + $0x30] sm:$0xff]
    %v114 = vld [vmem:[#allocation6 + $0x38] sm:$0xff]
    %v115 = vld [vmem:[#allocation6 + $0x40] sm:$0xff]
    %v116 = vld [vmem:[#allocation6 + $0x48] sm:$0xff]
    %v117 = vld [vmem:[#allocation6 + $0x50] sm:$0xff]
    %v118 = vld [vmem:[#allocation6 + $0x58] sm:$0xff]
    %v119 = vld [vmem:[#allocation6 + $0x60] sm:$0xff]
    %v120 = vld [vmem:[#allocation6 + $0x68] sm:$0xff]
    %v121 = vld [vmem:[#allocation6 + $0x70] sm:$0xff]
    %v122 = vld [vmem:[#allocation6 + $0x78] sm:$0xff]
    %v123 = vld [vmem:[#allocation2 + $0x1] sm:$0xff]
    %v124 = vld [vmem:[#allocation2 + $0x9] sm:$0xff]
    %s125 = scalar_lea.vmem [#allocation6], 128
    %v126 = vld [vmem:[%s125] sm:$0xff]
    %v127 = vld [vmem:[%s125 + $0x8] sm:$0xff]
    %v128 = vld [vmem:[%s125 + $0x10] sm:$0xff]
    %v129 = vld [vmem:[%s125 + $0x18] sm:$0xff]
    %v130 = vld [vmem:[%s125 + $0x20] sm:$0xff]
    %v131 = vld [vmem:[%s125 + $0x28] sm:$0xff]
    %v132 = vld [vmem:[%s125 + $0x30] sm:$0xff]
    %v133 = vld [vmem:[%s125 + $0x38] sm:$0xff]
    %v134 = vld [vmem:[%s125 + $0x40] sm:$0xff]
    %v135 = vld [vmem:[%s125 + $0x48] sm:$0xff]
    %v136 = vld [vmem:[%s125 + $0x50] sm:$0xff]
    %v137 = vld [vmem:[%s125 + $0x58] sm:$0xff]
    %v138 = vld [vmem:[%s125 + $0x60] sm:$0xff]
    %v139 = vld [vmem:[%s125 + $0x68] sm:$0xff]
    %v140 = vld [vmem:[%s125 + $0x70] sm:$0xff]
    %v141 = vld [vmem:[%s125 + $0x78] sm:$0xff]
    %142 = vmatpush.msra.mxu0 %v141
    %143 = vmatpush.msra.mxu0 %v140
    %144 = vmatpush.msra.mxu0 %v139
    %145 = vmatpush.msra.mxu0 %v138
    %146 = vmatpush.msra.mxu0 %v137
    %147 = vmatpush.msra.mxu0 %v136
    %148 = vmatpush.msra.mxu0 %v135
    %149 = vmatpush.msra.mxu0 %v134
    %150 = vmatpush.msra.mxu0 %v133
    %151 = vmatpush.msra.mxu0 %v132
    %152 = vmatpush.msra.mxu0 %v131
    %153 = vmatpush.msra.mxu0 %v130
    %154 = vmatpush.msra.mxu0 %v129
    %155 = vmatpush.msra.mxu0 %v128
    %156 = vmatpush.msra.mxu0 %v127
    %157 = vmatpush.msra.mxu0 %v126
    %158 = vmatmul.f32.gmra.mxu0 %v123
    %v159 = vpop.f32.mrf.mxu0
    %v160 = vadd.f32 0.0, %v159
    %161 = vmatmul.f32.gmra.mxu0 %v124
    %v162 = vpop.f32.mrf.mxu0
    %v163 = vadd.f32 0.0, %v162
    %164 = vdwg.mxu0
    %165 = vmatpush.msra.mxu0 %v122
    %166 = vmatpush.msra.mxu0 %v121
    %167 = vmatpush.msra.mxu0 %v120
    %168 = vmatpush.msra.mxu0 %v119
    %169 = vmatpush.msra.mxu0 %v118
    %170 = vmatpush.msra.mxu0 %v117
    %171 = vmatpush.msra.mxu0 %v116
    %172 = vmatpush.msra.mxu0 %v115
    %173 = vmatpush.msra.mxu0 %v114
    %174 = vmatpush.msra.mxu0 %v113
    %175 = vmatpush.msra.mxu0 %v112
    %176 = vmatpush.msra.mxu0 %v111
    %177 = vmatpush.msra.mxu0 %v110
    %178 = vmatpush.msra.mxu0 %v109
    %179 = vmatpush.msra.mxu0 %v108
    %180 = vmatpush.msra.mxu0 %v107
    %181 = vmatmul.f32.gmra.mxu0 %v105
    %v182 = vpop.f32.mrf.mxu0
    %v183 = vadd.f32 %v160, %v182
    %184 = vmatmul.f32.gmra.mxu0 %v106
    %v185 = vpop.f32.mrf.mxu0
    %v186 = vadd.f32 %v163, %v185
    %187 = vdwg.mxu0
    %v188 = vld [vmem:[#allocation2 + $0x2] sm:$0xff]
    %v189 = vld [vmem:[#allocation2 + $0xa] sm:$0xff]
    %s190 = scalar_lea.vmem [#allocation6], 256
    %v191 = vld [vmem:[%s190] sm:$0xff]
    %v192 = vld [vmem:[%s190 + $0x8] sm:$0xff]
    %v193 = vld [vmem:[%s190 + $0x10] sm:$0xff]
    %v194 = vld [vmem:[%s190 + $0x18] sm:$0xff]
    %v195 = vld [vmem:[%s190 + $0x20] sm:$0xff]
    %v196 = vld [vmem:[%s190 + $0x28] sm:$0xff]
    %v197 = vld [vmem:[%s190 + $0x30] sm:$0xff]
    %v198 = vld [vmem:[%s190 + $0x38] sm:$0xff]
    %v199 = vld [vmem:[%s190 + $0x40] sm:$0xff]
    %v200 = vld [vmem:[%s190 + $0x48] sm:$0xff]
    %v201 = vld [vmem:[%s190 + $0x50] sm:$0xff]
    %v202 = vld [vmem:[%s190 + $0x58] sm:$0xff]
    %v203 = vld [vmem:[%s190 + $0x60] sm:$0xff]
    %v204 = vld [vmem:[%s190 + $0x68] sm:$0xff]
    %v205 = vld [vmem:[%s190 + $0x70] sm:$0xff]
    %v206 = vld [vmem:[%s190 + $0x78] sm:$0xff]
    %207 = vmatpush.msra.mxu0 %v206
    %208 = vmatpush.msra.mxu0 %v205
    %209 = vmatpush.msra.mxu0 %v204
    %210 = vmatpush.msra.mxu0 %v203
    %211 = vmatpush.msra.mxu0 %v202
    %212 = vmatpush.msra.mxu0 %v201
    %213 = vmatpush.msra.mxu0 %v200
    %214 = vmatpush.msra.mxu0 %v199
    %215 = vmatpush.msra.mxu0 %v198
    %216 = vmatpush.msra.mxu0 %v197
    %217 = vmatpush.msra.mxu0 %v196
    %218 = vmatpush.msra.mxu0 %v195
    %219 = vmatpush.msra.mxu0 %v194
    %220 = vmatpush.msra.mxu0 %v193
    %221 = vmatpush.msra.mxu0 %v192
    %222 = vmatpush.msra.mxu0 %v191
    %223 = vmatmul.f32.gmra.mxu0 %v188
    %v224 = vpop.f32.mrf.mxu0
    %v225 = vadd.f32 0.0, %v224
    %226 = vmatmul.f32.gmra.mxu0 %v189
    %v227 = vpop.f32.mrf.mxu0
    %v228 = vadd.f32 0.0, %v227
    %229 = vdwg.mxu0
    %v230 = vadd.f32 %v183, %v225
    %v231 = vadd.f32 %v186, %v228
    %v232 = vld [vmem:[%s2] sm:$0x1]
    %v234 = vperm.slane %v232, 0
    %v236 = vadd.f32 %v230, %v234
    %v237 = vadd.f32 %v231, %v234
    %v238 = vadd.f32 %v236, %v237
    %v239 = vrot.slane %v238, 4
    %v240 = vadd.f32 %v238, %v239
    %v241 = vrot.slane %v240, 2
    %v242 = vadd.f32 %v240, %v241
    %v243 = vrot.slane %v242, 1
    %v244 = vadd.f32 %v242, %v243
    %v245 = vmul.f32 %v236, %v236
    %v246 = vmul.f32 %v237, %v237
    %v247 = vadd.f32 %v245, %v246
    %v248 = vrot.slane %v247, 4
    %v249 = vadd.f32 %v247, %v248
    %v250 = vrot.slane %v249, 2
    %v251 = vadd.f32 %v249, %v250
    %v252 = vrot.slane %v251, 1
    %v253 = vadd.f32 %v251, %v252
    %v254 = vld [vmem:[#allocation9] sm:$0xff]
    %v255 = vld [vmem:[#allocation9 + $0x8] sm:$0xff]
    %v256 = vld [vmem:[#allocation9 + $0x10] sm:$0xff]
    %v257 = vld [vmem:[#allocation9 + $0x18] sm:$0xff]
    %v258 = vld [vmem:[#allocation9 + $0x20] sm:$0xff]
    %v259 = vld [vmem:[#allocation9 + $0x28] sm:$0xff]
    %v260 = vld [vmem:[#allocation9 + $0x30] sm:$0xff]
    %v261 = vld [vmem:[#allocation9 + $0x38] sm:$0xff]
    %v262 = vld [vmem:[#allocation9 + $0x40] sm:$0xff]
    %v263 = vld [vmem:[#allocation9 + $0x48] sm:$0xff]
    %v264 = vld [vmem:[#allocation9 + $0x50] sm:$0xff]
    %v265 = vld [vmem:[#allocation9 + $0x58] sm:$0xff]
    %v266 = vld [vmem:[#allocation9 + $0x60] sm:$0xff]
    %v267 = vld [vmem:[#allocation9 + $0x68] sm:$0xff]
    %v268 = vld [vmem:[#allocation9 + $0x70] sm:$0xff]
    %v269 = vld [vmem:[#allocation9 + $0x78] sm:$0xff]
    %270 = vmatpush.msra.mxu0 %v269
    %271 = vmatpush.msra.mxu0 %v268
    %272 = vmatpush.msra.mxu0 %v267
    %273 = vmatpush.msra.mxu0 %v266
    %274 = vmatpush.msra.mxu0 %v265
    %275 = vmatpush.msra.mxu0 %v264
    %276 = vmatpush.msra.mxu0 %v263
    %277 = vmatpush.msra.mxu0 %v262
    %278 = vmatpush.msra.mxu0 %v261
    %279 = vmatpush.msra.mxu0 %v260
    %280 = vmatpush.msra.mxu0 %v259
    %281 = vmatpush.msra.mxu0 %v258
    %282 = vmatpush.msra.mxu0 %v257
    %283 = vmatpush.msra.mxu0 %v256
    %284 = vmatpush.msra.mxu0 %v255
    %285 = vmatpush.msra.mxu0 %v254
    %286 = vmatmul.f32.gmra.mxu0 %v244
    %v287 = vpop.f32.mrf.mxu0
    %v288 = vadd.f32 0.0, %v287
    %289 = vdwg.mxu0
    %290 = vmatpush.msra.mxu0 %v269
    %291 = vmatpush.msra.mxu0 %v268
    %292 = vmatpush.msra.mxu0 %v267
    %293 = vmatpush.msra.mxu0 %v266
    %294 = vmatpush.msra.mxu0 %v265
    %295 = vmatpush.msra.mxu0 %v264
    %296 = vmatpush.msra.mxu0 %v263
    %297 = vmatpush.msra.mxu0 %v262
    %298 = vmatpush.msra.mxu0 %v261
    %299 = vmatpush.msra.mxu0 %v260
    %300 = vmatpush.msra.mxu0 %v259
    %301 = vmatpush.msra.mxu0 %v258
    %302 = vmatpush.msra.mxu0 %v257
    %303 = vmatpush.msra.mxu0 %v256
    %304 = vmatpush.msra.mxu0 %v255
    %305 = vmatpush.msra.mxu0 %v254
    %306 = vmatmul.f32.gmra.mxu0 %v253
    %v307 = vpop.f32.mrf.mxu0
    %v308 = vadd.f32 0.0, %v307
    %309 = vdwg.mxu0
    %v310 = vmul.f32 %v288, %v288
    %v311 = vsub.f32 %v308, %v310
    %v312 = vadd.f32 %v311, 1e-05
    %v313 = vrsqrt.pop %v312
    %v314 = vmul.f32 %v313, %v312
    %v315 = vmul.f32 %v314, %v313
    %v316 = vmul.f32 0.5, %v315
    %v317 = vsub.f32 1.5, %v316
    %v318 = vmul.f32 %v313, %v317
    %vm319 = vweird.f32 %v312
    %vm320 = vweird.f32 %v313
    %vm321 = vmor %vm319, %vm320
    %v322 = vsel %vm321, %v313, %v318
    %v323 = vperm.slane %v288, 0
    %v324 = vsub.f32 %v236, %v323
    %v325 = vsub.f32 %v237, %v323
    %v326 = vld [vmem:[%s3] sm:$0x1]
    %v327 = vmul.f32 %v322, %v326
    %v328 = vperm.slane %v327, 0
    %v329 = vmul.f32 %v324, %v328
    %v330 = vmul.f32 %v325, %v328
    %v331 = vld [vmem:[%s4] sm:$0x1]
    %v333 = vperm.slane %v331, 0
    %v335 = vadd.f32 %v329, %v333
    %v336 = vadd.f32 %v330, %v333
    %v337 = vmax.f32 %v335, 0.0
    %v338 = vmax.f32 %v336, 0.0
    %339 = vst [vmem:[#allocation2 + $0x1] sm:$0xff] %v337
    %340 = vst [vmem:[#allocation2 + $0x9] sm:$0xff] %v338
    %v341 = vld [vmem:[#allocation2] sm:$0xff]
    %v342 = vld [vmem:[#allocation2 + $0x8] sm:$0xff]
    %v343 = vld [vmem:[#allocation8] sm:$0xff]
    %v344 = vld [vmem:[#allocation8 + $0x8] sm:$0xff]
    %v345 = vld [vmem:[#allocation8 + $0x10] sm:$0xff]
    %v346 = vld [vmem:[#allocation8 + $0x18] sm:$0xff]
    %v347 = vld [vmem:[#allocation8 + $0x20] sm:$0xff]
    %v348 = vld [vmem:[#allocation8 + $0x28] sm:$0xff]
    %v349 = vld [vmem:[#allocation8 + $0x30] sm:$0xff]
    %v350 = vld [vmem:[#allocation8 + $0x38] sm:$0xff]
    %v351 = vld [vmem:[#allocation8 + $0x40] sm:$0xff]
    %v352 = vld [vmem:[#allocation8 + $0x48] sm:$0xff]
    %v353 = vld [vmem:[#allocation8 + $0x50] sm:$0xff]
    %v354 = vld [vmem:[#allocation8 + $0x58] sm:$0xff]
    %v355 = vld [vmem:[#allocation8 + $0x60] sm:$0xff]
    %v356 = vld [vmem:[#allocation8 + $0x68] sm:$0xff]
    %v357 = vld [vmem:[#allocation8 + $0x70] sm:$0xff]
    %v358 = vld [vmem:[#allocation8 + $0x78] sm:$0xff]
    %v359 = vld [vmem:[#allocation2 + $0x1] sm:$0xff]
    %v360 = vld [vmem:[#allocation2 + $0x9] sm:$0xff]
    %s361 = scalar_lea.vmem [#allocation8], 128
    %v362 = vld [vmem:[%s361] sm:$0xff]
    %v363 = vld [vmem:[%s361 + $0x8] sm:$0xff]
    %v364 = vld [vmem:[%s361 + $0x10] sm:$0xff]
    %v365 = vld [vmem:[%s361 + $0x18] sm:$0xff]
    %v366 = vld [vmem:[%s361 + $0x20] sm:$0xff]
    %v367 = vld [vmem:[%s361 + $0x28] sm:$0xff]
    %v368 = vld [vmem:[%s361 + $0x30] sm:$0xff]
    %v369 = vld [vmem:[%s361 + $0x38] sm:$0xff]
    %v370 = vld [vmem:[%s361 + $0x40] sm:$0xff]
    %v371 = vld [vmem:[%s361 + $0x48] sm:$0xff]
    %v372 = vld [vmem:[%s361 + $0x50] sm:$0xff]
    %v373 = vld [vmem:[%s361 + $0x58] sm:$0xff]
    %v374 = vld [vmem:[%s361 + $0x60] sm:$0xff]
    %v375 = vld [vmem:[%s361 + $0x68] sm:$0xff]
    %v376 = vld [vmem:[%s361 + $0x70] sm:$0xff]
    %v377 = vld [vmem:[%s361 + $0x78] sm:$0xff]
    %378 = vmatpush.msra.mxu0 %v377
    %379 = vmatpush.msra.mxu0 %v376
    %380 = vmatpush.msra.mxu0 %v375
    %381 = vmatpush.msra.mxu0 %v374
    %382 = vmatpush.msra.mxu0 %v373
    %383 = vmatpush.msra.mxu0 %v372
    %384 = vmatpush.msra.mxu0 %v371
    %385 = vmatpush.msra.mxu0 %v370
    %386 = vmatpush.msra.mxu0 %v369
    %387 = vmatpush.msra.mxu0 %v368
    %388 = vmatpush.msra.mxu0 %v367
    %389 = vmatpush.msra.mxu0 %v366
    %390 = vmatpush.msra.mxu0 %v365
    %391 = vmatpush.msra.mxu0 %v364
    %392 = vmatpush.msra.mxu0 %v363
    %393 = vmatpush.msra.mxu0 %v362
    %394 = vmatmul.f32.gmra.mxu0 %v359
    %v395 = vpop.f32.mrf.mxu0
    %v396 = vadd.f32 0.0, %v395
    %397 = vmatmul.f32.gmra.mxu0 %v360
    %v398 = vpop.f32.mrf.mxu0
    %v399 = vadd.f32 0.0, %v398
    %400 = vdwg.mxu0
    %401 = vmatpush.msra.mxu0 %v358
    %402 = vmatpush.msra.mxu0 %v357
    %403 = vmatpush.msra.mxu0 %v356
    %404 = vmatpush.msra.mxu0 %v355
    %405 = vmatpush.msra.mxu0 %v354
    %406 = vmatpush.msra.mxu0 %v353
    %407 = vmatpush.msra.mxu0 %v352
    %408 = vmatpush.msra.mxu0 %v351
    %409 = vmatpush.msra.mxu0 %v350
    %410 = vmatpush.msra.mxu0 %v349
    %411 = vmatpush.msra.mxu0 %v348
    %412 = vmatpush.msra.mxu0 %v347
    %413 = vmatpush.msra.mxu0 %v346
    %414 = vmatpush.msra.mxu0 %v345
    %415 = vmatpush.msra.mxu0 %v344
    %416 = vmatpush.msra.mxu0 %v343
    %417 = vmatmul.f32.gmra.mxu0 %v341
    %v418 = vpop.f32.mrf.mxu0
    %v419 = vadd.f32 %v396, %v418
    %420 = vmatmul.f32.gmra.mxu0 %v342
    %v421 = vpop.f32.mrf.mxu0
    %v422 = vadd.f32 %v399, %v421
    %423 = vdwg.mxu0
    %v424 = vld [vmem:[#allocation2 + $0x2] sm:$0xff]
    %v425 = vld [vmem:[#allocation2 + $0xa] sm:$0xff]
    %s426 = scalar_lea.vmem [#allocation8], 256
    %v427 = vld [vmem:[%s426] sm:$0xff]
    %v428 = vld [vmem:[%s426 + $0x8] sm:$0xff]
    %v429 = vld [vmem:[%s426 + $0x10] sm:$0xff]
    %v430 = vld [vmem:[%s426 + $0x18] sm:$0xff]
    %v431 = vld [vmem:[%s426 + $0x20] sm:$0xff]
    %v432 = vld [vmem:[%s426 + $0x28] sm:$0xff]
    %v433 = vld [vmem:[%s426 + $0x30] sm:$0xff]
    %v434 = vld [vmem:[%s426 + $0x38] sm:$0xff]
    %v435 = vld [vmem:[%s426 + $0x40] sm:$0xff]
    %v436 = vld [vmem:[%s426 + $0x48] sm:$0xff]
    %v437 = vld [vmem:[%s426 + $0x50] sm:$0xff]
    %v438 = vld [vmem:[%s426 + $0x58] sm:$0xff]
    %v439 = vld [vmem:[%s426 + $0x60] sm:$0xff]
    %v440 = vld [vmem:[%s426 + $0x68] sm:$0xff]
    %v441 = vld [vmem:[%s426 + $0x70] sm:$0xff]
    %v442 = vld [vmem:[%s426 + $0x78] sm:$0xff]
    %443 = vmatpush.msra.mxu0 %v442
    %444 = vmatpush.msra.mxu0 %v441
    %445 = vmatpush.msra.mxu0 %v440
    %446 = vmatpush.msra.mxu0 %v439
    %447 = vmatpush.msra.mxu0 %v438
    %448 = vmatpush.msra.mxu0 %v437
    %449 = vmatpush.msra.mxu0 %v436
    %450 = vmatpush.msra.mxu0 %v435
    %451 = vmatpush.msra.mxu0 %v434
    %452 = vmatpush.msra.mxu0 %v433
    %453 = vmatpush.msra.mxu0 %v432
    %454 = vmatpush.msra.mxu0 %v431
    %455 = vmatpush.msra.mxu0 %v430
    %456 = vmatpush.msra.mxu0 %v429
    %457 = vmatpush.msra.mxu0 %v428
    %458 = vmatpush.msra.mxu0 %v427
    %459 = vmatmul.f32.gmra.mxu0 %v424
    %v460 = vpop.f32.mrf.mxu0
    %v461 = vadd.f32 0.0, %v460
    %462 = vmatmul.f32.gmra.mxu0 %v425
    %v463 = vpop.f32.mrf.mxu0
    %v464 = vadd.f32 0.0, %v463
    %465 = vdwg.mxu0
    %v466 = vadd.f32 %v419, %v461
    %v467 = vadd.f32 %v422, %v464
    %v468 = vld [vmem:[%s6] sm:$0x1]
    %v470 = vperm.slane %v468, 0
    %v472 = vadd.f32 %v466, %v470
    %v473 = vadd.f32 %v467, %v470
    %v474 = vadd.f32 %v472, %v473
    %v475 = vrot.slane %v474, 4
    %v476 = vadd.f32 %v474, %v475
    %v477 = vrot.slane %v476, 2
    %v478 = vadd.f32 %v476, %v477
    %v479 = vrot.slane %v478, 1
    %v480 = vadd.f32 %v478, %v479
    %v481 = vmul.f32 %v472, %v472
    %v482 = vmul.f32 %v473, %v473
    %v483 = vadd.f32 %v481, %v482
    %v484 = vrot.slane %v483, 4
    %v485 = vadd.f32 %v483, %v484
    %v486 = vrot.slane %v485, 2
    %v487 = vadd.f32 %v485, %v486
    %v488 = vrot.slane %v487, 1
    %v489 = vadd.f32 %v487, %v488
    %v490 = vld [vmem:[#allocation9] sm:$0xff]
    %v491 = vld [vmem:[#allocation9 + $0x8] sm:$0xff]
    %v492 = vld [vmem:[#allocation9 + $0x10] sm:$0xff]
    %v493 = vld [vmem:[#allocation9 + $0x18] sm:$0xff]
    %v494 = vld [vmem:[#allocation9 + $0x20] sm:$0xff]
    %v495 = vld [vmem:[#allocation9 + $0x28] sm:$0xff]
    %v496 = vld [vmem:[#allocation9 + $0x30] sm:$0xff]
    %v497 = vld [vmem:[#allocation9 + $0x38] sm:$0xff]
    %v498 = vld [vmem:[#allocation9 + $0x40] sm:$0xff]
    %v499 = vld [vmem:[#allocation9 + $0x48] sm:$0xff]
    %v500 = vld [vmem:[#allocation9 + $0x50] sm:$0xff]
    %v501 = vld [vmem:[#allocation9 + $0x58] sm:$0xff]
    %v502 = vld [vmem:[#allocation9 + $0x60] sm:$0xff]
    %v503 = vld [vmem:[#allocation9 + $0x68] sm:$0xff]
    %v504 = vld [vmem:[#allocation9 + $0x70] sm:$0xff]
    %v505 = vld [vmem:[#allocation9 + $0x78] sm:$0xff]
    %506 = vmatpush.msra.mxu0 %v505
    %507 = vmatpush.msra.mxu0 %v504
    %508 = vmatpush.msra.mxu0 %v503
    %509 = vmatpush.msra.mxu0 %v502
    %510 = vmatpush.msra.mxu0 %v501
    %511 = vmatpush.msra.mxu0 %v500
    %512 = vmatpush.msra.mxu0 %v499
    %513 = vmatpush.msra.mxu0 %v498
    %514 = vmatpush.msra.mxu0 %v497
    %515 = vmatpush.msra.mxu0 %v496
    %516 = vmatpush.msra.mxu0 %v495
    %517 = vmatpush.msra.mxu0 %v494
    %518 = vmatpush.msra.mxu0 %v493
    %519 = vmatpush.msra.mxu0 %v492
    %520 = vmatpush.msra.mxu0 %v491
    %521 = vmatpush.msra.mxu0 %v490
    %522 = vmatmul.f32.gmra.mxu0 %v480
    %v523 = vpop.f32.mrf.mxu0
    %v524 = vadd.f32 0.0, %v523
    %525 = vdwg.mxu0
    %526 = vmatpush.msra.mxu0 %v505
    %527 = vmatpush.msra.mxu0 %v504
    %528 = vmatpush.msra.mxu0 %v503
    %529 = vmatpush.msra.mxu0 %v502
    %530 = vmatpush.msra.mxu0 %v501
    %531 = vmatpush.msra.mxu0 %v500
    %532 = vmatpush.msra.mxu0 %v499
    %533 = vmatpush.msra.mxu0 %v498
    %534 = vmatpush.msra.mxu0 %v497
    %535 = vmatpush.msra.mxu0 %v496
    %536 = vmatpush.msra.mxu0 %v495
    %537 = vmatpush.msra.mxu0 %v494
    %538 = vmatpush.msra.mxu0 %v493
    %539 = vmatpush.msra.mxu0 %v492
    %540 = vmatpush.msra.mxu0 %v491
    %541 = vmatpush.msra.mxu0 %v490
    %542 = vmatmul.f32.gmra.mxu0 %v489
    %v543 = vpop.f32.mrf.mxu0
    %v544 = vadd.f32 0.0, %v543
    %545 = vdwg.mxu0
    %v546 = vmul.f32 %v524, %v524
    %v547 = vsub.f32 %v544, %v546
    %v548 = vadd.f32 %v547, 1e-05
    %v549 = vrsqrt.pop %v548
    %v550 = vmul.f32 %v549, %v548
    %v551 = vmul.f32 %v550, %v549
    %v552 = vmul.f32 0.5, %v551
    %v553 = vsub.f32 1.5, %v552
    %v554 = vmul.f32 %v549, %v553
    %vm555 = vweird.f32 %v548
    %vm556 = vweird.f32 %v549
    %vm557 = vmor %vm555, %vm556
    %v558 = vsel %vm557, %v549, %v554
    %v559 = vperm.slane %v524, 0
    %v560 = vsub.f32 %v472, %v559
    %v561 = vsub.f32 %v473, %v559
    %v562 = vld [vmem:[%s7] sm:$0x1]
    %v563 = vmul.f32 %v558, %v562
    %v564 = vperm.slane %v563, 0
    %v565 = vmul.f32 %v560, %v564
    %v566 = vmul.f32 %v561, %v564
    %v567 = vld [vmem:[%s8] sm:$0x1]
    %v569 = vperm.slane %v567, 0
    %v571 = vadd.f32 %v565, %v569
    %v572 = vadd.f32 %v566, %v569
    %v573 = vld [vmem:[#allocation3] sm:$0xff]
    %v574 = vld [vmem:[#allocation3 + $0x8] sm:$0xff]
    %v575 = vadd.f32 %v573, %v571
    %v576 = vadd.f32 %v574, %v572
    %v577 = vmax.f32 %v575, 0.0
    %v578 = vmax.f32 %v576, 0.0
    %579 = vst [vmem:[#allocation11] sm:$0xff] %v577
    %580 = vst [vmem:[#allocation11 + $0x8] sm:$0xff] %v578
    // Predicated region
    $region58: #{tpu_custom_call.1} parent=1 // pred_check
      _
    $region59: #{tpu_custom_call.1} parent=1 // pred_check_branch
      %582 = sbr.rel (0) target = $region61
    $region60: #{tpu_custom_call.1} parent=1 // pred_region
      %584 = vsyncadd [#allocation5], 0
      %s585 = sshll.u32 [#allocation11], 4
      %s586 = int_to_ptr.vmem [resolvable:$true] %s585
      %s587 = sshll.u32 %s10, 4
      %s588 = int_to_ptr.hbm [resolvable:$true] %s587
      %593 = dma.vmem_to_hbm [thread:$0]  %s586, 256, %s588, [#allocation5], 128, 128, 8
    $region61: #{tpu_custom_call.1} parent=1 // pred_fallthru
      _
    // Predicated region
    $region62: #{tpu_custom_call.1} parent=1 // pred_check
      _
    $region63: #{tpu_custom_call.1} parent=1 // pred_check_branch
      %595 = sbr.rel (0) target = $region65
    $region64: #{tpu_custom_call.1} parent=1 // pred_region
      %597 = dma.done [#allocation5], 256
    $region65: #{tpu_custom_call.1} parent=1 // pred_fallthru
      _
    %598 = vsyncpa [#allocation4], 1
    %599 = vsyncpa [#allocation7], 1
    %600 = vsyncpa [#allocation10], 1
    %601 = vsyncpa [#allocation5], 1

</llo_original>
